<compile_context>
chip_gen: v7x
topology: tpu7x:2x2x1
jax: 0.10.0
libtpu: 0.0.40
codegen_flags: <defaults>
</compile_context>

<pallas_src>
import functools

import jax
import jax.numpy as jnp
from jax import lax
from jax.experimental import pallas as pl
from jax.experimental.pallas import tpu as pltpu


# -----------------------------------------------------------------------------
# Fused Pallas kernel: conv(7x7/s2 as matmul) + BN(bias) + ReLU + maxpool 3x3/s2
# -----------------------------------------------------------------------------
def stem_fused_kernel(a_ref, b_ref, bias_ref, o_ref, yp_ref, *, OH, OW):
    """One image per grid step.

    a_ref    : (1, OH*OW, K)        bf16  im2col patches of this image
    b_ref    : (K, C)               bf16  conv weights with BN scale folded in
    bias_ref : (1, C)               f32   folded BN bias
    o_ref    : (1, PH, PW, C)       bf16  pooled output
    yp_ref   : (2*PH+1, 2*PW+1, C)  f32   VMEM scratch: zero-padded conv tile
    """
    _, PH, PW, C = o_ref.shape
    WP = 2 * PW + 1

    # --- conv + bias + relu (MXU, f32 accumulation) ---
    acc = jnp.dot(a_ref[0], b_ref[...], preferred_element_type=jnp.float32)
    y = jnp.maximum(acc + bias_ref[...], 0.0)                 # (OH*OW, C), >= 0

    # --- zero-padded conv tile in VMEM scratch ---
    # Zero padding == -inf padding here: data is post-ReLU (>= 0) and every
    # 3x3 pooling window contains at least one in-bounds element.
    yp_ref[...] = jnp.zeros_like(yp_ref)
    # Layout-trivial when OW % 8 == 0 (true for the 224-res stem and the test
    # shapes); otherwise Mosaic inserts a relayout.
    yp_ref[1:1 + OH, 1:1 + OW, :] = y.reshape(OH, OW, C)

    # --- row (H) pooling: padded rows {2p, 2p+1, 2p+2} -> pooled row p ---
    # Leading-dim pair-reshapes only (no sublane shuffles).
    rows = yp_ref[...]                                        # (2*PH+1, WP, C)
    a0 = jnp.max(rows[0:2 * PH].reshape(PH, 2, WP, C), axis=1)       # (2p, 2p+1)
    a1 = jnp.max(rows[1:2 * PH + 1].reshape(PH, 2, WP, C), axis=1)   # (2p+1, 2p+2)
    rmax = jnp.maximum(a0, a1)                                # (PH, WP, C)

    # --- column (W) pooling: padded cols {2q, 2q+1, 2q+2} -> pooled col q ---
    # Three stride-2 reads of the scratch (its first PH rows are reused).
    yp_ref[0:PH, :, :] = rmax
    cm = yp_ref[pl.ds(0, PH), pl.ds(0, PW, stride=2), :]
    cm = jnp.maximum(cm, yp_ref[pl.ds(0, PH), pl.ds(1, PW, stride=2), :])
    cm = jnp.maximum(cm, yp_ref[pl.ds(0, PH), pl.ds(2, PW, stride=2), :])

    o_ref[0] = cm.astype(o_ref.dtype)


# -----------------------------------------------------------------------------
# pallas_call wrapper
# -----------------------------------------------------------------------------
def stem_fused(patches, w2d, bias2d, *, OH, OW):
    """patches (N, OH*OW, K) bf16 @ w2d (K, C) bf16 + bias, ReLU, 3x3/s2 pool.

    Returns the pooled tensor (N, PH, PW, C) in bf16.
    """
    N, MHW, K = patches.shape
    assert MHW == OH * OW
    Cout = w2d.shape[1]
    PH = (OH - 1) // 2 + 1
    PW = (OW - 1) // 2 + 1
    kernel = functools.partial(stem_fused_kernel, OH=OH, OW=OW)
    return pl.pallas_call(
        kernel,
        out_shape=jax.ShapeDtypeStruct((N, PH, PW, Cout), jnp.bfloat16),
        grid=(N,),
        in_specs=[
            # one image's patches per step (pipelined / double-buffered)
            pl.BlockSpec((1, MHW, K), lambda n: (n, 0, 0)),
            # small operands with constant index maps -> stay resident
            pl.BlockSpec((K, Cout), lambda n: (0, 0)),
            pl.BlockSpec((1, Cout), lambda n: (0, 0)),
        ],
        out_specs=pl.BlockSpec((1, PH, PW, Cout), lambda n: (n, 0, 0, 0)),
        scratch_shapes=[pltpu.VMEM((2 * PH + 1, 2 * PW + 1, Cout), jnp.float32)],
        compiler_params=pltpu.CompilerParams(
            # grid = batch -> >= 2 steps in practice, so v7x's two TCs split it
            dimension_semantics=("parallel",),
            vmem_limit_bytes=32 * 1024 * 1024),
    )(patches, w2d, bias2d)


# -----------------------------------------------------------------------------
# Layout glue (im2col, plain JAX)
# -----------------------------------------------------------------------------
def im2col_taps(x_nhwc, kh, kw, stride, pad, out_dtype):
    """(N, OH*OW, kh*kw*C) patches with K ordered (kh, kw, c), built from
    kh*kw tap slices.  Input is cast to `out_dtype` before padding."""
    N, H, W, Cin = x_nhwc.shape
    OH = (H + 2 * pad - kh) // stride + 1
    OW = (W + 2 * pad - kw) // stride + 1
    xp = jnp.pad(x_nhwc.astype(out_dtype),
                 ((0, 0), (pad, pad), (pad, pad), (0, 0)))
    taps = [xp[:, i:i + stride * (OH - 1) + 1:stride,
               j:j + stride * (OW - 1) + 1:stride, :]
            for i in range(kh) for j in range(kw)]             # each (N, OH, OW, Cin)
    pats = jnp.stack(taps, axis=3)                             # (N, OH, OW, kh*kw, Cin)
    return pats.reshape(N, OH * OW, kh * kw * Cin), OH, OW


# -----------------------------------------------------------------------------
# thermal_module forward
# -----------------------------------------------------------------------------
def thermal_module_forward(x_nchw, params):
    w = params["conv_w"]                                       # (Cout, Cin, 7, 7)
    scale, bias = params["bn_scale"], params["bn_bias"]
    Cout, Cin, KH, KW = w.shape

    x_nhwc = jnp.transpose(x_nchw, (0, 2, 3, 1))
    patches, OH, OW = im2col_taps(x_nhwc, KH, KW, stride=2, pad=3,
                                  out_dtype=jnp.bfloat16)
    # Fold eval-mode BN scale into the conv weights (fold in f32, then bf16).
    w2d = (jnp.transpose(w, (2, 3, 1, 0)).reshape(KH * KW * Cin, Cout)
           * scale[None, :]).astype(jnp.bfloat16)
    bias2d = bias.reshape(1, Cout).astype(jnp.float32)

    p = stem_fused(patches, w2d, bias2d, OH=OH, OW=OW)         # (N, PH, PW, Cout) bf16
    # Cast to f32 only at the final NCHW transpose.
    return jnp.transpose(p, (0, 3, 1, 2)).astype(jnp.float32)


# -----------------------------------------------------------------------------
# Deterministic parameter init (synthetic "pretrained" stem)
# -----------------------------------------------------------------------------
def init_params(key, cin=3, cout=64, k=7, eps=1e-5):
    k1, k2, k3, k4, k5 = jax.random.split(key, 5)
    fan_in = cin * k * k
    conv_w = jax.random.normal(k1, (cout, cin, k, k), jnp.float32) / jnp.sqrt(fan_in)
    gamma = 1.0 + 0.1 * jax.random.normal(k2, (cout,), jnp.float32)
    beta = 0.1 * jax.random.normal(k3, (cout,), jnp.float32)
    run_mean = 0.1 * jax.random.normal(k4, (cout,), jnp.float32)
    run_var = jnp.abs(jax.random.normal(k5, (cout,), jnp.float32)) + 0.5
    scale = gamma / jnp.sqrt(run_var + eps)
    bias = beta - run_mean * scale
    return {"conv_w": conv_w, "bn_scale": scale, "bn_bias": bias}


# -----------------------------------------------------------------------------
# Pure-JAX reference (for sanity check)
# -----------------------------------------------------------------------------
def reference(x_nchw, params):
    w, scale, bias = params["conv_w"], params["bn_scale"], params["bn_bias"]
    y = lax.conv_general_dilated(x_nchw, w, (2, 2), ((3, 3), (3, 3)),
                                 dimension_numbers=("NCHW", "OIHW", "NCHW"))
    y = y * scale.reshape(1, -1, 1, 1) + bias.reshape(1, -1, 1, 1)
    y = jnp.maximum(y, 0.0)
    y = lax.reduce_window(y, -jnp.inf, lax.max, (1, 1, 3, 3), (1, 1, 2, 2),
                          ((0, 0), (0, 0), (1, 1), (1, 1)))
    return y


if __name__ == "__main__":
    key = jax.random.PRNGKey(0)
    kx, kp = jax.random.split(key)
    x = jax.random.normal(kx, (2, 3, 16, 16), jnp.float32)     # NCHW input
    params = init_params(kp)

    fwd = jax.jit(thermal_module_forward)
    out = jax.block_until_ready(fwd(x, params))
    assert out.shape == (2, 64, 4, 4), out.shape

    ref = reference(x, params)
    err = float(jnp.max(jnp.abs(out - ref)))
    denom = float(jnp.max(jnp.abs(ref))) + 1.0
    # bf16 matmul operands + bf16 pooled output (f32 accumulation):
    # ~0.5-1% relative error budget.
    assert err < 2e-2 * denom, f"max abs err {err} (denom {denom})"

    print("KERNEL_OK")
</pallas_src>

<mosaic_0001>
module attributes {stable_mosaic.version = 11 : i64} {
  func.func @stem_fused_kernel(%arg0: i32, %arg1: memref<1x64x147xbf16, #tpu.memory_space<vmem>>, %arg2: memref<147x64xbf16, #tpu.memory_space<vmem>>, %arg3: memref<1x64xf32, #tpu.memory_space<vmem>>, %arg4: memref<1x4x4x64xbf16, #tpu.memory_space<vmem>>, %arg5: memref<9x9x64xf32, #tpu.memory_space<vmem>>) attributes {dimension_semantics = [#tpu.dimension_semantics<parallel>], iteration_bounds = array<i64: 2>, scalar_prefetch = 0 : i64, scratch_operands = 1 : i64, tpu.core_type = #tpu.core_type<tc>, window_params = [{transform_indices = @transform_0, window_bounds = array<i64: 1, 64, 147>}, {pipeline_mode = #tpu.pipeline_mode<synchronous>, transform_indices = @transform_1, window_bounds = array<i64: 147, 64>}, {pipeline_mode = #tpu.pipeline_mode<synchronous>, transform_indices = @transform_2, window_bounds = array<i64: 1, 64>}, {transform_indices = @transform_3, window_bounds = array<i64: 1, 4, 4, 64>}]} {
    %c0 = arith.constant 0 : index
    %c0_0 = arith.constant 0 : index
    %c0_1 = arith.constant 0 : index
    %0 = vector.load %arg1[%c0, %c0_0, %c0_1] : memref<1x64x147xbf16, #tpu.memory_space<vmem>>, vector<1x64x147xbf16>
    %1 = vector.shape_cast %0 : vector<1x64x147xbf16> to vector<64x147xbf16>
    %c0_2 = arith.constant 0 : index
    %c0_3 = arith.constant 0 : index
    %2 = vector.load %arg2[%c0_2, %c0_3] : memref<147x64xbf16, #tpu.memory_space<vmem>>, vector<147x64xbf16>
    %cst = arith.constant dense<0.000000e+00> : vector<64x64xf32>
    %3 = tpu.matmul %1, %2, %cst {dimension_numbers = #tpu.dot_dimension_numbers<[1], [0], [0], [1], [0, 0, 1, 1], [], []>} : vector<64x147xbf16>, vector<147x64xbf16>, vector<64x64xf32> -> vector<64x64xf32>
    %c0_4 = arith.constant 0 : index
    %c0_5 = arith.constant 0 : index
    %4 = vector.load %arg3[%c0_4, %c0_5] : memref<1x64xf32, #tpu.memory_space<vmem>>, vector<1x64xf32>
    %5 = vector.broadcast %4 : vector<1x64xf32> to vector<64x64xf32>
    %6 = arith.addf %3, %5 : vector<64x64xf32>
    %cst_6 = arith.constant 0.000000e+00 : f32
    %7 = vector.broadcast %cst_6 : f32 to vector<64x64xf32>
    %8 = arith.maximumf %6, %7 : vector<64x64xf32>
    %cst_7 = arith.constant 0.000000e+00 : f32
    %9 = vector.broadcast %cst_7 : f32 to vector<9x9x64xf32>
    %c0_8 = arith.constant 0 : index
    %c0_9 = arith.constant 0 : index
    %c0_10 = arith.constant 0 : index
    %10 = vector.load %arg5[%c0_8, %c0_9, %c0_10] : memref<9x9x64xf32, #tpu.memory_space<vmem>>, vector<9x9x64xf32>
    tpu.vector_store %arg5[%c0_8, %c0_9, %c0_10], %9 {strides = array<i32>} : memref<9x9x64xf32, #tpu.memory_space<vmem>>, vector<9x9x64xf32>,
    %11 = vector.shape_cast %8 : vector<64x64xf32> to vector<8x8x64xf32>
    %c1 = arith.constant 1 : index
    %c1_11 = arith.constant 1 : index
    %c0_12 = arith.constant 0 : index
    %12 = vector.load %arg5[%c1, %c1_11, %c0_12] : memref<9x9x64xf32, #tpu.memory_space<vmem>>, vector<8x8x64xf32>
    tpu.vector_store %arg5[%c1, %c1_11, %c0_12], %11 {strides = array<i32>} : memref<9x9x64xf32, #tpu.memory_space<vmem>>, vector<8x8x64xf32>,
    %c0_13 = arith.constant 0 : index
    %c0_14 = arith.constant 0 : index
    %c0_15 = arith.constant 0 : index
    %13 = vector.load %arg5[%c0_13, %c0_14, %c0_15] : memref<9x9x64xf32, #tpu.memory_space<vmem>>, vector<9x9x64xf32>
    %14 = vector.extract_strided_slice %13 {offsets = [0, 0, 0], sizes = [8, 9, 64], strides = [1, 1, 1]} : vector<9x9x64xf32> to vector<8x9x64xf32>
    %15 = vector.shape_cast %14 : vector<8x9x64xf32> to vector<4x2x9x64xf32>
    %cst_16 = arith.constant dense<0xFF800000> : vector<4x9x64xf32>
    %16 = vector.multi_reduction <maximumf>, %15, %cst_16 [1] : vector<4x2x9x64xf32> to vector<4x9x64xf32>
    %17 = vector.extract_strided_slice %13 {offsets = [1, 0, 0], sizes = [8, 9, 64], strides = [1, 1, 1]} : vector<9x9x64xf32> to vector<8x9x64xf32>
    %18 = vector.shape_cast %17 : vector<8x9x64xf32> to vector<4x2x9x64xf32>
    %cst_17 = arith.constant dense<0xFF800000> : vector<4x9x64xf32>
    %19 = vector.multi_reduction <maximumf>, %18, %cst_17 [1] : vector<4x2x9x64xf32> to vector<4x9x64xf32>
    %20 = arith.maximumf %16, %19 : vector<4x9x64xf32>
    %c0_18 = arith.constant 0 : index
    %c0_19 = arith.constant 0 : index
    %c0_20 = arith.constant 0 : index
    %21 = vector.load %arg5[%c0_18, %c0_19, %c0_20] : memref<9x9x64xf32, #tpu.memory_space<vmem>>, vector<4x9x64xf32>
    tpu.vector_store %arg5[%c0_18, %c0_19, %c0_20], %20 {strides = array<i32>} : memref<9x9x64xf32, #tpu.memory_space<vmem>>, vector<4x9x64xf32>,
    %c0_21 = arith.constant 0 : index
    %c0_22 = arith.constant 0 : index
    %c0_23 = arith.constant 0 : index
    %22 = tpu.strided_load %arg5[%c0_21, %c0_22, %c0_23] {strides = array<i32: 1, 2, 1>} : memref<9x9x64xf32, #tpu.memory_space<vmem>>, vector<4x4x64xf32>
    %c0_24 = arith.constant 0 : index
    %c1_25 = arith.constant 1 : index
    %c0_26 = arith.constant 0 : index
    %23 = tpu.strided_load %arg5[%c0_24, %c1_25, %c0_26] {strides = array<i32: 1, 2, 1>} : memref<9x9x64xf32, #tpu.memory_space<vmem>>, vector<4x4x64xf32>
    %24 = arith.maximumf %22, %23 : vector<4x4x64xf32>
    %c0_27 = arith.constant 0 : index
    %c2 = arith.constant 2 : index
    %c0_28 = arith.constant 0 : index
    %25 = tpu.strided_load %arg5[%c0_27, %c2, %c0_28] {strides = array<i32: 1, 2, 1>} : memref<9x9x64xf32, #tpu.memory_space<vmem>>, vector<4x4x64xf32>
    %26 = arith.maximumf %24, %25 : vector<4x4x64xf32>
    %27 = arith.truncf %26 : vector<4x4x64xf32> to vector<4x4x64xbf16>
    %c0_29 = arith.constant 0 : index
    %c0_30 = arith.constant 0 : index
    %c0_31 = arith.constant 0 : index
    %c0_32 = arith.constant 0 : index
    %28 = vector.load %arg4[%c0_29, %c0_30, %c0_31, %c0_32] : memref<1x4x4x64xbf16, #tpu.memory_space<vmem>>, vector<1x4x4x64xbf16>
    %29 = vector.shape_cast %28 : vector<1x4x4x64xbf16> to vector<4x4x64xbf16>
    %30 = vector.shape_cast %27 : vector<4x4x64xbf16> to vector<1x4x4x64xbf16>
    tpu.vector_store %arg4[%c0_29, %c0_30, %c0_31, %c0_32], %30 {strides = array<i32>} : memref<1x4x4x64xbf16, #tpu.memory_space<vmem>>, vector<1x4x4x64xbf16>,
    return
  }
  func.func @transform_0(%arg0: i32) -> (i32, i32, i32) {
    %c0_i32 = arith.constant 0 : i32
    %c0_i32_0 = arith.constant 0 : i32
    %c0_i32_1 = arith.constant 0 : i32
    return %arg0, %c0_i32, %c0_i32_0 : i32, i32, i32
  }
  func.func @transform_1(%arg0: i32) -> (i32, i32) {
    %c0_i32 = arith.constant 0 : i32
    %c0_i32_0 = arith.constant 0 : i32
    %c0_i32_1 = arith.constant 0 : i32
    return %c0_i32, %c0_i32_0 : i32, i32
  }
  func.func @transform_2(%arg0: i32) -> (i32, i32) {
    %c0_i32 = arith.constant 0 : i32
    %c0_i32_0 = arith.constant 0 : i32
    %c0_i32_1 = arith.constant 0 : i32
    return %c0_i32, %c0_i32_0 : i32, i32
  }
  func.func @transform_3(%arg0: i32) -> (i32, i32, i32, i32) {
    %c0_i32 = arith.constant 0 : i32
    %c0_i32_0 = arith.constant 0 : i32
    %c0_i32_1 = arith.constant 0 : i32
    %c0_i32_2 = arith.constant 0 : i32
    return %arg0, %c0_i32, %c0_i32_0, %c0_i32_1 : i32, i32, i32, i32
  }
}

</mosaic_0001>

<llo_original>
// kernel: thermal_module_forward.1
$region0: #{thermal_module_forward.1}
  #allocation0 [shape = 'u32[]', space=smem, size = 0x4, offset = 0x4, fixed_abs, tag = 'smem constant byte address 0x4 - core index']
  #allocation1 [shape = 'u32[144,128]{1,0:T(1,128)}', space=vmem, size = 0x12000, scoped, tag = 'internal scratch']
  #allocation2 [shape = 'f32[9,9,64]{2,1,0:T(8,128)}', space=vmem, size = 0x12000, scoped, tag = 'scratch operand']
  %s0 = inlined_call_operand.vmem [shape: bf16[2,64,147], index: 0, kind: input, shape index: {}]
  %s1 = inlined_call_operand.vmem [shape: bf16[147,64], index: 1, kind: input, shape index: {}]
  %s2 = inlined_call_operand.vmem [shape: f32[1,64], index: 2, kind: input, shape index: {}]
  %s3 = inlined_call_operand.vmem [shape: bf16[2,4,4,64], index: 3, kind: output, shape index: {}]
  %s4 = sld [smem:[#allocation0]]
  $region45: #{thermal_module_forward.1} parent=0
    _
  %s6 = ssub.s32 1, %s4
  %s7 = scalar_select 0, %s6, %s4
  loop: start=0, step=1, limit=4
  $region2: #{thermal_module_forward.1} parent=0 // loop_pre_header
    _
  $region3: #{thermal_module_forward.1} parent=0 // loop_header
    %s9 = sphi 0, %s13
    %p10 = scmp.ge.s32.totalorder %s9, 4
    %s19 = sphi 0, %s21
    %s22 = sphi 0, %s19
    %s23 = sphi 0, %s22
    %s39 = sphi 0, %s23
    %s43 = sphi 0, %s43
    %s45 = sphi 0, %s43
    %s46 = sphi 0, %s45
    %s60 = sphi 0, %s46
    %s64 = sphi 0, %s64
    %s66 = sphi 0, %s64
    %s67 = sphi 0, %s66
    %s81 = sphi 0, %s67
    %s87 = sphi 0, %s89
    %s90 = sphi 0, %s87
    %s91 = sphi 0, %s90
    %s107 = sphi 0, %s91
  $region4: #{thermal_module_forward.1} parent=0 // loop_header_branch
    %12 = sbr.rel (%p10) target = $region8
  $region5: #{thermal_module_forward.1} parent=0 // loop_body
    %s14 = ssub.s32 %s9, 1
    %s15 = ssub.s32 %s9, 2
    %s16 = sadd.s32 %s9, 1
    %s17 = ssub.s32 %s9, %s16
    %p18 = scmp.eq.s32.totalorder %s17, 0
    %s20 = sadd.s32 %s19, 1
    %s21 = scalar_select %p18, %s19, %s20
    %p24 = pneg %p18
    %p25 = scmp.eq.s32.totalorder %s9, 1
    %p26 = por %p24, %p25
    %p27 = scmp.ne.s32.totalorder %s19, %s22
    %p28 = scmp.eq.s32.totalorder %s9, 0
    %p29 = por %p27, %p28
    %p30 = scmp.ne.s32.totalorder %s19, %s22
    %p31 = scmp.eq.s32.totalorder %s14, 1
    %p32 = por %p30, %p31
    %p33 = scmp.ne.s32.totalorder %s22, %s23
    %p34 = scmp.eq.s32.totalorder %s14, 0
    %p35 = por %p33, %p34
    %p36 = scmp.ne.s32.totalorder %s22, %s23
    %p37 = scmp.eq.s32.totalorder %s15, 1
    %p38 = por %p36, %p37
    %p40 = scmp.ne.s32.totalorder %s23, %s39
    %p41 = scmp.eq.s32.totalorder %s15, 0
    %p42 = por %p40, %p41
    %s44 = sadd.s32 %s43, 1
    %p47 = scmp.eq.s32.totalorder %s9, 1
    %p48 = scmp.ne.s32.totalorder %s43, %s45
    %p49 = scmp.eq.s32.totalorder %s9, 0
    %p50 = por %p48, %p49
    %p51 = scmp.ne.s32.totalorder %s43, %s45
    %p52 = scmp.eq.s32.totalorder %s14, 1
    %p53 = por %p51, %p52
    %p54 = scmp.ne.s32.totalorder %s45, %s46
    %p55 = scmp.eq.s32.totalorder %s14, 0
    %p56 = por %p54, %p55
    %p57 = scmp.ne.s32.totalorder %s45, %s46
    %p58 = scmp.eq.s32.totalorder %s15, 1
    %p59 = por %p57, %p58
    %p61 = scmp.ne.s32.totalorder %s46, %s60
    %p62 = scmp.eq.s32.totalorder %s15, 0
    %p63 = por %p61, %p62
    %s65 = sadd.s32 %s64, 1
    %p68 = scmp.eq.s32.totalorder %s9, 1
    %p69 = scmp.ne.s32.totalorder %s64, %s66
    %p70 = scmp.eq.s32.totalorder %s9, 0
    %p71 = por %p69, %p70
    %p72 = scmp.ne.s32.totalorder %s64, %s66
    %p73 = scmp.eq.s32.totalorder %s14, 1
    %p74 = por %p72, %p73
    %p75 = scmp.ne.s32.totalorder %s66, %s67
    %p76 = scmp.eq.s32.totalorder %s14, 0
    %p77 = por %p75, %p76
    %p78 = scmp.ne.s32.totalorder %s66, %s67
    %p79 = scmp.eq.s32.totalorder %s15, 1
    %p80 = por %p78, %p79
    %p82 = scmp.ne.s32.totalorder %s67, %s81
    %p83 = scmp.eq.s32.totalorder %s15, 0
    %p84 = por %p82, %p83
    %s85 = ssub.s32 %s9, %s16
    %p86 = scmp.eq.s32.totalorder %s85, 0
    %s88 = sadd.s32 %s87, 1
    %s89 = scalar_select %p86, %s87, %s88
    %p92 = pneg %p86
    %p93 = scmp.eq.s32.totalorder %s9, 1
    %p94 = por %p92, %p93
    %p95 = scmp.ne.s32.totalorder %s87, %s90
    %p96 = scmp.eq.s32.totalorder %s9, 0
    %p97 = por %p95, %p96
    %p98 = scmp.ne.s32.totalorder %s87, %s90
    %p99 = scmp.eq.s32.totalorder %s14, 1
    %p100 = por %p98, %p99
    %p101 = scmp.ne.s32.totalorder %s90, %s91
    %p102 = scmp.eq.s32.totalorder %s14, 0
    %p103 = por %p101, %p102
    %p104 = scmp.ne.s32.totalorder %s90, %s91
    %p105 = scmp.eq.s32.totalorder %s15, 1
    %p106 = por %p104, %p105
    %p108 = scmp.ne.s32.totalorder %s91, %s107
    %p109 = scmp.eq.s32.totalorder %s15, 0
    %p110 = por %p108, %p109
    %p111 = scmp.le.s32.totalorder 1, %s9
    %p112 = scmp.lt.s32.totalorder %s9, 3
    %p113 = pnand %p111, %p112
    %p114 = pneg %p113
    // Predicated region
    $region9: #{thermal_module_forward.1} parent=5 // pred_check
      _
    $region10: #{thermal_module_forward.1} parent=5 // pred_check_branch
      %116 = sbr.rel (%p113) target = $region12
    $region11: #{thermal_module_forward.1} parent=5 // pred_region
      %s117 = ssub.s32 %s9, 1
      // Predicated region
      $region13: #{thermal_module_forward.1} parent=11 // pred_check
        %p118 = pneg %p56
      $region14: #{thermal_module_forward.1} parent=11 // pred_check_branch
        %120 = sbr.rel (%p118) target = $region16
      $region15: #{thermal_module_forward.1} parent=11 // pred_region
        _
      $region16: #{thermal_module_forward.1} parent=11 // pred_fallthru
        _
      // Predicated region
      $region17: #{thermal_module_forward.1} parent=11 // pred_check
        %p121 = pneg %p77
      $region18: #{thermal_module_forward.1} parent=11 // pred_check_branch
        %123 = sbr.rel (%p121) target = $region20
      $region19: #{thermal_module_forward.1} parent=11 // pred_region
        _
      $region20: #{thermal_module_forward.1} parent=11 // pred_fallthru
        _
    $region12: #{thermal_module_forward.1} parent=5 // pred_fallthru
      _
    %p124 = scmp.lt.s32.totalorder %s9, 2
    // Predicated region
    $region21: #{thermal_module_forward.1} parent=5 // pred_check
      %p125 = pneg %p124
    $region22: #{thermal_module_forward.1} parent=5 // pred_check_branch
      %127 = sbr.rel (%p125) target = $region24
    $region23: #{thermal_module_forward.1} parent=5 // pred_region
      // Predicated region
      $region25: #{thermal_module_forward.1} parent=23 // pred_check
        %p128 = pneg %p29
      $region26: #{thermal_module_forward.1} parent=23 // pred_check_branch
        %130 = sbr.rel (%p128) target = $region28
      $region27: #{thermal_module_forward.1} parent=23 // pred_region
        %p131 = scmp.lt.s32.totalorder %s9, 1
        %s132 = scalar_select %p131, %s9, 1
        %s133 = smul.addr %s132, 16
        %s134 = smul.addr %s133, 4
        %s135 = scalar_lea.vmem %s0, %s134
      $region28: #{thermal_module_forward.1} parent=23 // pred_fallthru
        _
    $region24: #{thermal_module_forward.1} parent=5 // pred_fallthru
      _
    %p136 = scmp.le.s32.totalorder 1, %s9
    %p137 = scmp.lt.s32.totalorder %s9, 3
    %p138 = pnand %p136, %p137
    %p139 = pneg %p138
    // Predicated region
    $region29: #{thermal_module_forward.1} parent=5 // pred_check
      _
    $region30: #{thermal_module_forward.1} parent=5 // pred_check_branch
      %141 = sbr.rel (%p138) target = $region32
    $region31: #{thermal_module_forward.1} parent=5 // pred_region
      %s142 = ssub.s32 %s9, 1
      %p143 = scmp.lt.s32.totalorder %s14, 1
      %s144 = scalar_select %p143, %s14, 1
      %s145 = smul.addr %s144, 16
      %s146 = smul.addr %s145, 4
      %s147 = scalar_lea.vmem %s0, %s146
      %p148 = pneg %p35
      %p149 = pneg %p32
      %p150 = pneg %p56
      %p151 = pneg %p53
      %p152 = pneg %p77
      %p153 = pneg %p74
      %p154 = pneg %p103
      %p155 = pneg %p100
      %p156 = scmp.lt.s32.totalorder %s14, 1
      %s157 = scalar_select %p156, %s14, 1
      %s158 = smul.addr %s157, 4
      %s159 = smul.addr %s158, 2
      %s160 = scalar_lea.vmem %s3, %s159
      %p161 = scmp.lt.s32.totalorder %s14, 1
      %s162 = scalar_select %p161, %s14, 1
      %s163 = smul.addr %s162, 16
      %s164 = smul.addr %s163, 4
      %s165 = scalar_lea.vmem %s0, %s164
      %p166 = scmp.lt.s32.totalorder %s14, 1
      %s167 = scalar_select %p166, %s14, 1
      %s168 = smul.addr %s167, 4
      %s169 = smul.addr %s168, 2
      %s170 = scalar_lea.vmem %s3, %s169
      %v172 = vld [vmem:[%s165] sm:$0xff]
      %v173 = vld [vmem:[%s165 + $0x8] sm:$0xff]
      %v174 = vld [vmem:[%s165 + $0x10] sm:$0xff]
      %v175 = vld [vmem:[%s165 + $0x18] sm:$0xff]
      %v176 = vld [vmem:[%s165 + $0x20] sm:$0xff]
      %v177 = vld [vmem:[%s165 + $0x28] sm:$0xff]
      %v178 = vld [vmem:[%s165 + $0x30] sm:$0xff]
      %v179 = vld [vmem:[%s165 + $0x38] sm:$0xff]
      %v180 = vld [vmem:[%s1] sm:$0xf]
      %v181 = vld [vmem:[%s1 + $0x4] sm:$0xf]
      %v182 = vld [vmem:[%s1 + $0x8] sm:$0xf]
      %v183 = vld [vmem:[%s1 + $0xc] sm:$0xf]
      %v184 = vld [vmem:[%s1 + $0x10] sm:$0xf]
      %v185 = vld [vmem:[%s1 + $0x14] sm:$0xf]
      %v186 = vld [vmem:[%s1 + $0x18] sm:$0xf]
      %v187 = vld [vmem:[%s1 + $0x1c] sm:$0xf]
      %v188 = vld [vmem:[%s1 + $0x20] sm:$0xf]
      %v189 = vld [vmem:[%s1 + $0x24] sm:$0xf]
      %v190 = vld [vmem:[%s1 + $0x28] sm:$0xf]
      %v191 = vld [vmem:[%s1 + $0x2c] sm:$0xf]
      %v192 = vld [vmem:[%s1 + $0x30] sm:$0xf]
      %v193 = vld [vmem:[%s1 + $0x34] sm:$0xf]
      %v194 = vld [vmem:[%s1 + $0x38] sm:$0xf]
      %v195 = vld [vmem:[%s1 + $0x3c] sm:$0xf]
      %v196 = vld [vmem:[%s1 + $0x40] sm:$0xf]
      %v197 = vld [vmem:[%s1 + $0x44] sm:$0xf]
      %v198 = vld [vmem:[%s1 + $0x48] sm:$0x3]
      %v199 = vld [vmem:[%s2] sm:$0x1]
      %v201 = vlaneseq
      %v202 = vshrl.u32 %v201, 7
      %v203 = vsub.s32 0, %v202
      %v204 = vrot.slane %v199, %v203
      %v214 = vunpack.c.l.b16 %v172
      %v215 = vunpack.c.h.b16 %v172
      %v216 = vunpack.c.l.b16 %v173
      %v217 = vunpack.c.h.b16 %v173
      %v218 = vunpack.c.l.b16 %v174
      %v219 = vunpack.c.h.b16 %v174
      %v220 = vunpack.c.l.b16 %v175
      %v221 = vunpack.c.h.b16 %v175
      %v222 = vunpack.c.l.b16 %v176
      %v223 = vunpack.c.h.b16 %v176
      %v224 = vunpack.c.l.b16 %v177
      %v225 = vunpack.c.h.b16 %v177
      %v226 = vunpack.c.l.b16 %v178
      %v227 = vunpack.c.h.b16 %v178
      %v228 = vunpack.c.l.b16 %v179
      %v229 = vunpack.c.h.b16 %v179
      %v230 = vpack.c.b16 %v216, %v214
      %v231 = vpack.c.b16 %v217, %v215
      %v232 = vpack.c.b16 %v220, %v218
      %v233 = vpack.c.b16 %v221, %v219
      %v234 = vpack.c.b16 %v224, %v222
      %v235 = vpack.c.b16 %v225, %v223
      %v236 = vpack.c.b16 %v228, %v226
      %v237 = vpack.c.b16 %v229, %v227
      %v261 = vunpack.c.l.b16 %v180
      %v262 = vunpack.c.l.b16 %v181
      %v263 = vunpack.c.l.b16 %v182
      %v264 = vunpack.c.l.b16 %v183
      %v265 = vunpack.c.l.b16 %v184
      %v266 = vunpack.c.l.b16 %v185
      %v267 = vunpack.c.l.b16 %v186
      %v268 = vunpack.c.l.b16 %v187
      %v269 = vunpack.c.l.b16 %v188
      %v270 = vunpack.c.l.b16 %v189
      %v271 = vunpack.c.l.b16 %v190
      %v272 = vunpack.c.l.b16 %v191
      %v273 = vunpack.c.l.b16 %v192
      %v274 = vunpack.c.l.b16 %v193
      %v275 = vunpack.c.l.b16 %v194
      %v276 = vunpack.c.l.b16 %v195
      %v277 = vunpack.c.l.b16 %v196
      %v278 = vunpack.c.l.b16 %v197
      %v279 = vunpack.c.l.b16 %v198
      %v280 = vpack.c.b16 %v262, %v261
      %v281 = vpack.c.b16 %v264, %v263
      %v282 = vpack.c.b16 %v266, %v265
      %v283 = vpack.c.b16 %v268, %v267
      %v284 = vpack.c.b16 %v270, %v269
      %v285 = vpack.c.b16 %v272, %v271
      %v286 = vpack.c.b16 %v274, %v273
      %v287 = vpack.c.b16 %v276, %v275
      %v288 = vpack.c.b16 %v278, %v277
      %v289 = vpack.c.b16 %v279, %v279
      %vm299 = vcmask 154624
      %v301 = vsel %vm299, %v231, 0
      %v304 = vsel %vm299, %v233, 0
      %v307 = vsel %vm299, %v235, 0
      %v310 = vsel %vm299, %v237, 0
      %vm312 = vcmask 1040384
      %vm313 = vcmask 1041408
      %v314 = vsel %vm312, 4294967295, 65535
      %v315 = vsel %vm313, %v314, 0
      %v317 = vand.u32 %v289, %v315
      %319 = vmatprep.subr.bf16.mxu0 0
      %320 = vmatpush1.bf16.msra.mxu0 %v280
      %321 = vmatprep.subr.bf16.mxu0 0
      %322 = vmatpush1.bf16.msra.mxu0 %v281
      %323 = vmatprep.subr.bf16.mxu0 0
      %324 = vmatpush1.bf16.msra.mxu0 %v282
      %325 = vmatprep.subr.bf16.mxu0 0
      %326 = vmatpush1.bf16.msra.mxu0 %v283
      %327 = vmatprep.subr.bf16.mxu0 0
      %328 = vmatpush1.bf16.msra.mxu0 %v284
      %329 = vmatprep.subr.bf16.mxu0 0
      %330 = vmatpush1.bf16.msra.mxu0 %v285
      %331 = vmatprep.subr.bf16.mxu0 0
      %332 = vmatpush1.bf16.msra.mxu0 %v286
      %333 = vmatprep.subr.bf16.mxu0 0
      %334 = vmatpush1.bf16.msra.mxu0 %v287
      %335 = vmatprep.subr.bf16.mxu0 0
      %336 = vmatpush1.bf16.msra.mxu0 %v288
      %337 = vmatprep.subr.bf16.mxu0 0
      %338 = vmatpush1.bf16.msra.mxu0 %v317
      %339 = vmatprep.subr.bf16.mxu0 0
      %340 = vmatpush1.bf16.msra.mxu0 0
      %341 = vmatprep.subr.bf16.mxu0 0
      %342 = vmatpush1.bf16.msra.mxu0 0
      %343 = vmatprep.subr.bf16.mxu0 0
      %344 = vmatpush1.bf16.msra.mxu0 0
      %345 = vmatprep.subr.bf16.mxu0 0
      %346 = vmatpush1.bf16.msra.mxu0 0
      %347 = vmatprep.subr.bf16.mxu0 0
      %348 = vmatpush1.bf16.msra.mxu0 0
      %349 = vmatprep.subr.bf16.mxu0 0
      %350 = vmatpush1.bf16.msra.mxu0 0
      %351 = vmatprep.mubr.bf16.mxu0 %v301
      %352 = vmatmul.mubr.bf16.gmra.mrb[0].mxu0 %v230
      %v353 = vpop.f32.mrb[0].mxu0
      %v354 = vadd.f32 %v204, %v353
      %v355 = vpop.f32.mrb[0].mxu0
      %v356 = vpop.f32.mrb[0].mxu0
      %v357 = vadd.f32 %v204, %v356
      %v358 = vpop.f32.mrb[0].mxu0
      %359 = vmatprep.mubr.bf16.mxu0 %v304
      %360 = vmatmul.mubr.bf16.gmra.mrb[0].mxu0 %v232
      %v361 = vpop.f32.mrb[0].mxu0
      %v362 = vadd.f32 %v204, %v361
      %v363 = vpop.f32.mrb[0].mxu0
      %v364 = vpop.f32.mrb[0].mxu0
      %v365 = vadd.f32 %v204, %v364
      %v366 = vpop.f32.mrb[0].mxu0
      %367 = vmatprep.mubr.bf16.mxu0 %v307
      %368 = vmatmul.mubr.bf16.gmra.mrb[0].mxu0 %v234
      %v369 = vpop.f32.mrb[0].mxu0
      %v370 = vadd.f32 %v204, %v369
      %v371 = vpop.f32.mrb[0].mxu0
      %v372 = vpop.f32.mrb[0].mxu0
      %v373 = vadd.f32 %v204, %v372
      %v374 = vpop.f32.mrb[0].mxu0
      %375 = vmatprep.mubr.bf16.mxu0 %v310
      %376 = vmatmul.mubr.bf16.gmra.mrb[0].mxu0 %v236
      %v377 = vpop.f32.mrb[0].mxu0
      %v378 = vadd.f32 %v204, %v377
      %v379 = vpop.f32.mrb[0].mxu0
      %v380 = vpop.f32.mrb[0].mxu0
      %v381 = vadd.f32 %v204, %v380
      %v382 = vpop.f32.mrb[0].mxu0
      %383 = vdwg.mxu0
      %v384 = vmax.f32 %v354, 0.0
      %v385 = vmax.f32 %v357, 0.0
      %v386 = vmax.f32 %v362, 0.0
      %v387 = vmax.f32 %v365, 0.0
      %v388 = vmax.f32 %v370, 0.0
      %v389 = vmax.f32 %v373, 0.0
      %v390 = vmax.f32 %v378, 0.0
      %v391 = vmax.f32 %v381, 0.0
      %vm392 = vcmask 523264
      %393 = vst.msk [vmem:[#allocation2] sm:$0xff] %vm392, 0.0
      %vm394 = vcmask 516096
      %395 = vst.msk [vmem:[#allocation2 + $0x8] sm:$0x1] %vm394, 0.0
      %396 = vst.msk [vmem:[#allocation2 + $0x10] sm:$0xff] %vm392, 0.0
      %397 = vst.msk [vmem:[#allocation2 + $0x18] sm:$0x1] %vm394, 0.0
      %398 = vst.msk [vmem:[#allocation2 + $0x20] sm:$0xff] %vm392, 0.0
      %399 = vst.msk [vmem:[#allocation2 + $0x28] sm:$0x1] %vm394, 0.0
      %400 = vst.msk [vmem:[#allocation2 + $0x30] sm:$0xff] %vm392, 0.0
      %401 = vst.msk [vmem:[#allocation2 + $0x38] sm:$0x1] %vm394, 0.0
      %402 = vst.msk [vmem:[#allocation2 + $0x40] sm:$0xff] %vm392, 0.0
      %403 = vst.msk [vmem:[#allocation2 + $0x48] sm:$0x1] %vm394, 0.0
      %404 = vst.msk [vmem:[#allocation2 + $0x50] sm:$0xff] %vm392, 0.0
      %405 = vst.msk [vmem:[#allocation2 + $0x58] sm:$0x1] %vm394, 0.0
      %406 = vst.msk [vmem:[#allocation2 + $0x60] sm:$0xff] %vm392, 0.0
      %407 = vst.msk [vmem:[#allocation2 + $0x68] sm:$0x1] %vm394, 0.0
      %408 = vst.msk [vmem:[#allocation2 + $0x70] sm:$0xff] %vm392, 0.0
      %409 = vst.msk [vmem:[#allocation2 + $0x78] sm:$0x1] %vm394, 0.0
      %410 = vst.msk [vmem:[#allocation2 + $0x80] sm:$0xff] %vm392, 0.0
      %411 = vst.msk [vmem:[#allocation2 + $0x88] sm:$0x1] %vm394, 0.0
      %s412 = scalar_lea.vmem [#allocation2], 16
      %413 = vst.msk [vmem:[%s412 + $0x1] sm:$0xff] %vm392, %v384
      %414 = vst.msk [vmem:[%s412 + $0x11] sm:$0xff] %vm392, %v385
      %415 = vst.msk [vmem:[%s412 + $0x21] sm:$0xff] %vm392, %v386
      %416 = vst.msk [vmem:[%s412 + $0x31] sm:$0xff] %vm392, %v387
      %417 = vst.msk [vmem:[%s412 + $0x41] sm:$0xff] %vm392, %v388
      %418 = vst.msk [vmem:[%s412 + $0x51] sm:$0xff] %vm392, %v389
      %419 = vst.msk [vmem:[%s412 + $0x61] sm:$0xff] %vm392, %v390
      %420 = vst.msk [vmem:[%s412 + $0x71] sm:$0xff] %vm392, %v391
      %v421 = vld [vmem:[#allocation2] sm:$0xff]
      %v422 = vld [vmem:[#allocation2 + $0x8] sm:$0x1]
      %v423 = vld [vmem:[#allocation2 + $0x10] sm:$0xff]
      %v424 = vld [vmem:[#allocation2 + $0x18] sm:$0x1]
      %v425 = vld [vmem:[#allocation2 + $0x20] sm:$0xff]
      %v426 = vld [vmem:[#allocation2 + $0x28] sm:$0x1]
      %v427 = vld [vmem:[#allocation2 + $0x30] sm:$0xff]
      %v428 = vld [vmem:[#allocation2 + $0x38] sm:$0x1]
      %v429 = vld [vmem:[#allocation2 + $0x40] sm:$0xff]
      %v430 = vld [vmem:[#allocation2 + $0x48] sm:$0x1]
      %v431 = vld [vmem:[#allocation2 + $0x50] sm:$0xff]
      %v432 = vld [vmem:[#allocation2 + $0x58] sm:$0x1]
      %v433 = vld [vmem:[#allocation2 + $0x60] sm:$0xff]
      %v434 = vld [vmem:[#allocation2 + $0x68] sm:$0x1]
      %v435 = vld [vmem:[#allocation2 + $0x70] sm:$0xff]
      %v436 = vld [vmem:[#allocation2 + $0x78] sm:$0x1]
      %v437 = vld [vmem:[#allocation2 + $0x80] sm:$0xff]
      %v438 = vld [vmem:[#allocation2 + $0x88] sm:$0x1]
      %v439 = vsel %vm392, %v421, -inf
      %v440 = vsel %vm392, %v423, -inf
      %v441 = vmax.f32 %v439, %v440
      %v442 = vsel %vm394, %v422, -inf
      %v443 = vsel %vm394, %v424, -inf
      %v444 = vmax.f32 %v442, %v443
      %v445 = vsel %vm392, %v425, -inf
      %v446 = vsel %vm392, %v427, -inf
      %v447 = vmax.f32 %v445, %v446
      %v448 = vsel %vm394, %v426, -inf
      %v449 = vsel %vm394, %v428, -inf
      %v450 = vmax.f32 %v448, %v449
      %v451 = vsel %vm392, %v429, -inf
      %v452 = vsel %vm392, %v431, -inf
      %v453 = vmax.f32 %v451, %v452
      %v454 = vsel %vm394, %v430, -inf
      %v455 = vsel %vm394, %v432, -inf
      %v456 = vmax.f32 %v454, %v455
      %v457 = vsel %vm392, %v433, -inf
      %v458 = vsel %vm392, %v435, -inf
      %v459 = vmax.f32 %v457, %v458
      %v460 = vsel %vm394, %v434, -inf
      %v461 = vsel %vm394, %v436, -inf
      %v462 = vmax.f32 %v460, %v461
      %v463 = vmax.f32 %v440, %v445
      %v464 = vmax.f32 %v443, %v448
      %v465 = vmax.f32 %v446, %v451
      %v466 = vmax.f32 %v449, %v454
      %v467 = vmax.f32 %v452, %v457
      %v468 = vmax.f32 %v455, %v460
      %v469 = vsel %vm392, %v437, -inf
      %v470 = vmax.f32 %v458, %v469
      %v471 = vsel %vm394, %v438, -inf
      %v472 = vmax.f32 %v461, %v471
      %v473 = vmax.f32 %v441, %v463
      %v474 = vmax.f32 %v444, %v464
      %v475 = vmax.f32 %v447, %v465
      %v476 = vmax.f32 %v450, %v466
      %v477 = vmax.f32 %v453, %v467
      %v478 = vmax.f32 %v456, %v468
      %v479 = vmax.f32 %v459, %v470
      %v480 = vmax.f32 %v462, %v472
      %481 = vst.msk [vmem:[#allocation2] sm:$0xff] %vm392, %v473
      %482 = vst.msk [vmem:[#allocation2 + $0x8] sm:$0x1] %vm394, %v474
      %483 = vst.msk [vmem:[#allocation2 + $0x10] sm:$0xff] %vm392, %v475
      %484 = vst.msk [vmem:[#allocation2 + $0x18] sm:$0x1] %vm394, %v476
      %485 = vst.msk [vmem:[#allocation2 + $0x20] sm:$0xff] %vm392, %v477
      %486 = vst.msk [vmem:[#allocation2 + $0x28] sm:$0x1] %vm394, %v478
      %487 = vst.msk [vmem:[#allocation2 + $0x30] sm:$0xff] %vm392, %v479
      %488 = vst.msk [vmem:[#allocation2 + $0x38] sm:$0x1] %vm394, %v480
      %v489 = vld [vmem:[#allocation2] ss:$2 sm:$0xf]
      %s490 = scalar_lea.vmem [#allocation2], 16
      %v491 = vld [vmem:[%s490] ss:$2 sm:$0xf]
      %s492 = scalar_lea.vmem [#allocation2], 32
      %v493 = vld [vmem:[%s492] ss:$2 sm:$0xf]
      %s494 = scalar_lea.vmem [#allocation2], 48
      %v495 = vld [vmem:[%s494] ss:$2 sm:$0xf]
      %s496 = scalar_lea.vmem [#allocation2], 1
      %v497 = vld [vmem:[%s496] ss:$2 sm:$0xf]
      %s498 = scalar_lea.vmem [#allocation2], 17
      %v499 = vld [vmem:[%s498] ss:$2 sm:$0xf]
      %s500 = scalar_lea.vmem [#allocation2], 33
      %v501 = vld [vmem:[%s500] ss:$2 sm:$0xf]
      %s502 = scalar_lea.vmem [#allocation2], 49
      %v503 = vld [vmem:[%s502] ss:$2 sm:$0xf]
      %v504 = vmax.f32 %v489, %v497
      %v505 = vmax.f32 %v491, %v499
      %v506 = vmax.f32 %v493, %v501
      %v507 = vmax.f32 %v495, %v503
      %s508 = scalar_lea.vmem [#allocation2], 2
      %v509 = vld [vmem:[%s508] ss:$2 sm:$0xf]
      %s510 = scalar_lea.vmem [#allocation2], 18
      %v511 = vld [vmem:[%s510] ss:$2 sm:$0xf]
      %s512 = scalar_lea.vmem [#allocation2], 34
      %v513 = vld [vmem:[%s512] ss:$2 sm:$0xf]
      %s514 = scalar_lea.vmem [#allocation2], 50
      %v515 = vld [vmem:[%s514] ss:$2 sm:$0xf]
      %v516 = vmax.f32 %v504, %v509
      %v517 = vmax.f32 %v505, %v511
      %v518 = vmax.f32 %v506, %v513
      %v519 = vmax.f32 %v507, %v515
      %v520 = vpack.c.bf16 %v516, %v516
      %v521 = vpack.c.bf16 %v517, %v517
      %v522 = vpack.c.bf16 %v518, %v518
      %v523 = vpack.c.bf16 %v519, %v519
      %vm524 = vcmask 517120
      %525 = vst.msk [vmem:[%s170] sm:$0x3] %vm524, %v520
      %526 = vst.msk [vmem:[%s170 + $0x2] sm:$0x3] %vm524, %v521
      %527 = vst.msk [vmem:[%s170 + $0x4] sm:$0x3] %vm524, %v522
      %528 = vst.msk [vmem:[%s170 + $0x6] sm:$0x3] %vm524, %v523
      %p529 = scmp.lt.s32.totalorder %s14, 1
      %s530 = scalar_select %p529, %s14, 1
      %s531 = smul.addr %s530, 4
      %s532 = smul.addr %s531, 2
      %s533 = scalar_lea.vmem %s3, %s532
      // Predicated region
      $region33: #{thermal_module_forward.1} parent=31 // pred_check
        %p534 = pneg %p100
      $region34: #{thermal_module_forward.1} parent=31 // pred_check_branch
        %536 = sbr.rel (%p534) target = $region36
      $region35: #{thermal_module_forward.1} parent=31 // pred_region
        _
      $region36: #{thermal_module_forward.1} parent=31 // pred_fallthru
        _
    $region32: #{thermal_module_forward.1} parent=5 // pred_fallthru
      _
    %p537 = scmp.le.s32.totalorder 2, %s9
    // Predicated region
    $region37: #{thermal_module_forward.1} parent=5 // pred_check
      %p538 = pneg %p537
    $region38: #{thermal_module_forward.1} parent=5 // pred_check_branch
      %540 = sbr.rel (%p538) target = $region40
    $region39: #{thermal_module_forward.1} parent=5 // pred_region
      %s541 = ssub.s32 %s9, 2
      // Predicated region
      $region41: #{thermal_module_forward.1} parent=39 // pred_check
        %p542 = pneg %p106
      $region42: #{thermal_module_forward.1} parent=39 // pred_check_branch
        %544 = sbr.rel (%p542) target = $region44
      $region43: #{thermal_module_forward.1} parent=39 // pred_region
        %p545 = scmp.lt.s32.totalorder %s15, 1
        %s546 = scalar_select %p545, %s15, 1
        %s547 = smul.addr %s546, 4
        %s548 = smul.addr %s547, 2
        %s549 = scalar_lea.vmem %s3, %s548
      $region44: #{thermal_module_forward.1} parent=39 // pred_fallthru
        _
    $region40: #{thermal_module_forward.1} parent=5 // pred_fallthru
      _
  $region6: #{thermal_module_forward.1} parent=0 // loop_footer
    %s13 = sadd.s32 1, %s9
  $region7: #{thermal_module_forward.1} parent=0 // loop_footer_branch
    %8 = sbr.rel target = $region3
  $region8: #{thermal_module_forward.1} parent=0 // loop_exit
    _

</llo_original>
